<compile_context>
chip_gen: v7x
topology: tpu7x:2x2x1
jax: 0.10.0
libtpu: 0.0.40
codegen_flags: <defaults>
</compile_context>

<pallas_src>
import jax
import jax.numpy as jnp
from jax.experimental import pallas as pl
from jax.experimental.pallas import tpu as pltpu


def _alias_identity_kernel(x_ref, o_ref):
    # The output HBM buffer aliases the input buffer, so the bytes are already
    # in place; just pin a read/write dependency so the call is neither elided
    # nor reordered. Zero bytes moved by the kernel body.
    pltpu.touch(x_ref)
    pltpu.touch(o_ref)


@jax.jit
def _identity_alias(x):
    return pl.pallas_call(
        _alias_identity_kernel,
        out_shape=jax.ShapeDtypeStruct(x.shape, x.dtype),
        in_specs=[pl.BlockSpec(memory_space=pl.ANY)],
        out_specs=pl.BlockSpec(memory_space=pl.ANY),
        # Identity op: the output IS the input buffer.
        input_output_aliases={0: 0},
    )(x)


def _dma_identity_kernel(x_ref, o_ref, sem):
    # Fallback: one direct HBM->HBM DMA of the whole tensor (no VMEM staging,
    # no vld/vst bundle work, single grid step).
    cp = pltpu.make_async_copy(x_ref, o_ref, sem)
    cp.start()
    cp.wait()


@jax.jit
def _identity_dma(x):
    return pl.pallas_call(
        _dma_identity_kernel,
        out_shape=jax.ShapeDtypeStruct(x.shape, x.dtype),
        in_specs=[pl.BlockSpec(memory_space=pl.ANY)],
        out_specs=pl.BlockSpec(memory_space=pl.ANY),
        scratch_shapes=[pltpu.SemaphoreType.DMA],
    )(x)


_USE_ALIAS_PATH = True


def dummy_transformer_block(x):
    """Identity forward pass of DummyTransformerBlock via a Pallas TPU kernel."""
    global _USE_ALIAS_PATH
    if _USE_ALIAS_PATH:
        try:
            return _identity_alias(x)
        except Exception:  # Only if touch/alias is unsupported on this build.
            _USE_ALIAS_PATH = False
    return _identity_dma(x)


if __name__ == "__main__":
    key = jax.random.PRNGKey(0)
    batch, seq, emb = 2, 8, 32
    x = jax.random.normal(key, (batch, seq, emb), dtype=jnp.float32)

    # The module's __init__ takes a cfg but defines no parameters, so there is
    # nothing to initialize.
    y = dummy_transformer_block(x)
    y = jax.block_until_ready(y)

    assert y.shape == x.shape and y.dtype == x.dtype
    assert bool(jnp.array_equal(y, x))
    print("KERNEL_OK")
</pallas_src>

<mosaic_0001>
module attributes {stable_mosaic.version = 11 : i64} {
  func.func @_alias_identity_kernel(%arg0: memref<2x8x32xf32, #tpu.memory_space<any>>, %arg1: memref<2x8x32xf32, #tpu.memory_space<any>>) attributes {dimension_semantics = [], scalar_prefetch = 0 : i64, scratch_operands = 0 : i64, tpu.core_type = #tpu.core_type<tc>} {
    return
  }
}

module attributes {stable_mosaic.version = 11 : i64} {
  func.func @_dma_identity_kernel(%arg0: memref<2x8x32xf32, #tpu.memory_space<any>>, %arg1: memref<2x8x32xf32, #tpu.memory_space<any>>, %arg2: memref<!tpu.dma_semaphore, #tpu.memory_space<semaphore_mem>>) attributes {dimension_semantics = [], scalar_prefetch = 0 : i64, scratch_operands = 1 : i64, tpu.core_type = #tpu.core_type<tc>} {
    tpu.enqueue_dma source(%arg0 : memref<2x8x32xf32, #tpu.memory_space<any>>) target(%arg1 : memref<2x8x32xf32, #tpu.memory_space<any>>) target_semaphore(%arg2 : memref<!tpu.dma_semaphore, #tpu.memory_space<semaphore_mem>>)
    tpu.wait_dma2 semaphore(%arg2 : memref<!tpu.dma_semaphore, #tpu.memory_space<semaphore_mem>>) src(%arg0 : memref<2x8x32xf32, #tpu.memory_space<any>>) dst(%arg1 : memref<2x8x32xf32, #tpu.memory_space<any>>)
    return
  }
}

</mosaic_0001>

<llo_original>
// kernel: _identity_alias.1
$region0: #{_identity_alias.1}
  #allocation0 [shape = 'u32[]', space=smem, size = 0x4, offset = 0x4, fixed_abs, tag = 'smem constant byte address 0x4 - core index']
  #allocation1 [shape = 'u32[144,128]{1,0:T(1,128)}', space=vmem, size = 0x12000, scoped, tag = 'internal scratch']
  %s0 = inlined_call_operand.hbm [shape: f32[2,8,32], index: 0, kind: input, shape index: {}, may-alias: {0,1}]
  %s1 = inlined_call_operand.hbm [shape: f32[2,8,32], index: 1, kind: output, shape index: {}, may-alias: {0,1}]
  %s2 = sld [smem:[#allocation0]]
  $region2: #{_identity_alias.1} parent=0
    _
  %s4 = ssub.s32 1, %s2
  %s5 = scalar_select 0, %s4, %s2

// kernel: _identity_dma.1
$region0: #{_identity_dma.1}
  #allocation0 [shape = 'u32[]', space=smem, size = 0x4, offset = 0x4, fixed_abs, tag = 'smem constant byte address 0x4 - core index']
  #allocation1 [shape = 'u32[144,128]{1,0:T(1,128)}', space=vmem, size = 0x12000, scoped, tag = 'internal scratch']
  #allocation2 [shape = 's32[1]{0}', space=sflag, size = 0x4, scoped, tag = 'scratch operand']
  #allocation3 [shape = 's32[]', space=sflag, size = 0x4, offset = 0, fixed_abs, tag = 'sflag constant byte address 0x0 - dummy sync flag']
  #allocation4 [shape = 'u32[0]{0}', space=smem, size = 0, offset = 0, fixed_abs, tag = 'smem constant byte address 0x0 - null']
  %s0 = inlined_call_operand.hbm [shape: f32[2,8,32], index: 0, kind: input, shape index: {}]
  %s1 = inlined_call_operand.hbm [shape: f32[2,8,32], index: 1, kind: output, shape index: {}]
  %s2 = sld [smem:[#allocation0]]
  $region2: #{_identity_dma.1} parent=0
    _
  %s4 = ssub.s32 1, %s2
  %s5 = scalar_select 0, %s4, %s2
  %s7 = sshll.u32 1, 14
  %s8 = sxor.u32 4294967295, %s7
  %s11 = sshll.u32 3, 24
  %s12 = sxor.u32 4294967295, %s11
  %s13 = sand.u32 0, %s12
  %s15 = sor.u32 %s13, 0
  %18 = dma.general %s0, 256, %s1, [#allocation2], [#allocation3], [#allocation4], %s15, 0
  %s19 = smul.u32 2, 8
  %s20 = smul.u32 %s19, 1
  %s21 = sshll.u32 %s20, 4
  %22 = dma.done [#allocation2], %s21
  %23 = vsyncmov [#allocation2]
  %s24 = vpop.sfrf %23
  %p25 = scmp.eq.s32.totalorder %s24, 0
  %p26 = pneg %p25
  %28 = shalt.err (%p26)

</llo_original>
